<compile_context>
chip_gen: v7x
topology: tpu7x:2x2x1
jax: 0.10.0
libtpu: 0.0.40
codegen_flags: <defaults>
</compile_context>

<pallas_src>
import functools

import jax
import jax.numpy as jnp
from jax.experimental import pallas as pl
from jax.experimental.pallas import tpu as pltpu

HIDDEN = 50
BN_EPS = 1e-5
LANE = 128
SUBLANE = 8
VMEM_BUDGET_BYTES = 24 * 1024 * 1024   # stay under the 32 MiB scoped default


def _round_up(n, m):
    return (n + m - 1) // m * m


def _pad2(a, rows, cols):
    """Zero-pad a 2D array up to (rows, cols)."""
    out = jnp.zeros((rows, cols), a.dtype)
    return out.at[: a.shape[0], : a.shape[1]].set(a)


def _fold_bn_into_linear(w, b, gamma, beta, mean, var):
    """Return (W', b') such that (x @ W' + b') == BN(x @ W + b) in eval mode."""
    scale = gamma / jnp.sqrt(var + BN_EPS)        # (1, n)
    shift = beta - mean * scale                   # (1, n)
    return w * scale, b * scale + shift


# ----------------------------------------------------------------------------
# Kernel: one batch tile per grid step; all (padded) weights stay resident.
# Matmul operands use the weights' dtype (f32 or bf16); accumulation is f32.
# ----------------------------------------------------------------------------
def _mlp_kernel(x_ref, w1_ref, w2_ref, w3_ref, bias_ref, out_ref):
    cdt = w1_ref.dtype                       # MXU operand dtype
    x = x_ref[...].astype(cdt)

    # Block 1: Linear (+ folded BN) -> ReLU   [Dropout = identity in eval mode]
    # TODO(synk): Dropout(p=0.5) is stochastic in training mode; eval is identity.
    h = jnp.dot(x, w1_ref[...], preferred_element_type=jnp.float32) + bias_ref[0:1, :]
    h = jnp.maximum(h, 0.0)

    # Block 2: Linear (+ folded BN) -> ReLU
    h = jnp.dot(h.astype(cdt), w2_ref[...],
                preferred_element_type=jnp.float32) + bias_ref[1:2, :]
    h = jnp.maximum(h, 0.0)

    # Output head: Linear
    out_ref[...] = (jnp.dot(h.astype(cdt), w3_ref[...],
                            preferred_element_type=jnp.float32) + bias_ref[2:3, :])


# ----------------------------------------------------------------------------
# Parameters (PyTorch-default-like init + deterministic BN running stats)
# ----------------------------------------------------------------------------
def init_params(key, in_channel, out_channel):
    ks = jax.random.split(key, 8)

    def lin(kw, kb, fan_in, fan_out):
        bound = 1.0 / jnp.sqrt(jnp.float32(fan_in))
        w = jax.random.uniform(kw, (fan_in, fan_out), jnp.float32, -bound, bound)
        b = jax.random.uniform(kb, (1, fan_out), jnp.float32, -bound, bound)
        return w, b

    w1, b1 = lin(ks[0], ks[1], in_channel, HIDDEN)
    w2, b2 = lin(ks[2], ks[3], HIDDEN, HIDDEN)
    w3, b3 = lin(ks[4], ks[5], HIDDEN, out_channel)

    def bn(kmean, n):
        gamma = jnp.ones((1, n), jnp.float32)
        beta = jnp.zeros((1, n), jnp.float32)
        running_mean = 0.1 * jax.random.normal(kmean, (1, n), jnp.float32)
        running_var = (jnp.ones((1, n), jnp.float32)
                       + 0.05 * jnp.arange(n, dtype=jnp.float32)[None, :] / n)
        return gamma, beta, running_mean, running_var

    return dict(w1=w1, b1=b1, bn1=bn(ks[6], HIDDEN),
                w2=w2, b2=b2, bn2=bn(ks[7], HIDDEN),
                w3=w3, b3=b3)


# ----------------------------------------------------------------------------
# One-time prep: fold BN, pad weights to lane-dense shapes, pack biases.
# ----------------------------------------------------------------------------
def prepare_params(params, *, operand_dtype=jnp.float32):
    """Call once; the result feeds cnn_policy_forward. Zero-padding of the
    hidden/output columns is numerically exact (zero cols -> relu(0)=0 ->
    zero rows of the next W)."""
    w1f, b1f = _fold_bn_into_linear(params["w1"], params["b1"], *params["bn1"])
    w2f, b2f = _fold_bn_into_linear(params["w2"], params["b2"], *params["bn2"])
    w3f, b3f = params["w3"], params["b3"]

    F = params["w1"].shape[0]
    out_channel = params["w3"].shape[1]
    FP = _round_up(F, LANE)
    N = max(_round_up(HIDDEN, LANE), _round_up(out_channel, LANE))

    bias = jnp.zeros((SUBLANE, N), jnp.float32)
    bias = bias.at[0, :HIDDEN].set(b1f[0])
    bias = bias.at[1, :HIDDEN].set(b2f[0])
    bias = bias.at[2, :out_channel].set(b3f[0])

    prep = dict(
        w1=_pad2(w1f, FP, N).astype(operand_dtype),
        w2=_pad2(w2f, N, N).astype(operand_dtype),
        w3=_pad2(w3f, N, N).astype(operand_dtype),
        bias=bias,                      # biases added after f32 accumulation
        in_features=F, fp=FP, n=N, out_channel=out_channel,
    )
    # Materialize now so nothing is recomputed per forward call.
    for k, v in prep.items():
        if isinstance(v, jax.Array):
            prep[k] = jax.block_until_ready(v)
    return prep


def _choose_row_tile(B, FP, N, row_tile):
    """Row tile: multiple of 8, <= row_tile, >= 2 balanced grid steps when the
    batch allows (v7x megacore), and bounded so per-step VMEM stays small."""
    Bp = _round_up(max(B, 1), SUBLANE)
    TM = min(_round_up(row_tile, SUBLANE), Bp)
    steps = pl.cdiv(Bp, TM)
    if Bp >= 2 * SUBLANE and steps < 2:
        steps = 2
    TM = _round_up(pl.cdiv(Bp, steps), SUBLANE)     # rebalance (avoid tiny tail)

    # VMEM guard (matters for large flattened F, esp. v7x's 64 MiB VMEM):
    # double-buffered x tile + out tile + (conservatively double-buffered) weights.
    weight_bytes = 2 * (FP * N + 2 * N * N + SUBLANE * N) * 4
    per_row_bytes = (FP + N) * 4 * 2
    max_tm = max(SUBLANE,
                 ((VMEM_BUDGET_BYTES - weight_bytes) // per_row_bytes)
                 // SUBLANE * SUBLANE)
    return max(SUBLANE, min(TM, max_tm))


# ----------------------------------------------------------------------------
# Forward: flatten, (optionally) pad features, grid over batch. Jit-able.
# ----------------------------------------------------------------------------
def cnn_policy_forward(x_nchw, prep, *, row_tile=512):
    B = x_nchw.shape[0]
    x = x_nchw.reshape(B, -1).astype(jnp.float32)      # nn.Flatten()
    F, FP, N = prep["in_features"], prep["fp"], prep["n"]
    assert x.shape[1] == F, (x.shape, F)

    # Pad features only when unavoidable (F % 128 != 0). The batch axis is
    # never padded: a partial last block is masked by Pallas and the junk rows
    # (row-independent) never reach the valid output rows.
    if FP != F:
        x = jnp.pad(x, ((0, 0), (0, FP - F)))

    TM = _choose_row_tile(B, FP, N, row_tile)
    grid = (pl.cdiv(B, TM),)

    out = pl.pallas_call(
        _mlp_kernel,
        out_shape=jax.ShapeDtypeStruct((B, N), jnp.float32),
        grid_spec=pltpu.PrefetchScalarGridSpec(
            num_scalar_prefetch=0,
            grid=grid,
            in_specs=[
                pl.BlockSpec((TM, FP), lambda i: (i, 0)),       # x tile (pipelined)
                pl.BlockSpec((FP, N), lambda i: (0, 0)),        # W1 (resident)
                pl.BlockSpec((N, N), lambda i: (0, 0)),         # W2 (resident)
                pl.BlockSpec((N, N), lambda i: (0, 0)),         # W3 (resident)
                pl.BlockSpec((SUBLANE, N), lambda i: (0, 0)),   # packed biases
            ],
            out_specs=pl.BlockSpec((TM, N), lambda i: (i, 0)),
        ),
        compiler_params=pltpu.CompilerParams(
            dimension_semantics=("parallel",)),
    )(x, prep["w1"], prep["w2"], prep["w3"], prep["bias"])

    return out[:, :prep["out_channel"]]


# ----------------------------------------------------------------------------
# Pure-JAX reference (eval-mode PyTorch semantics)
# ----------------------------------------------------------------------------
def reference_forward(x_nchw, params):
    B = x_nchw.shape[0]
    x = x_nchw.reshape(B, -1).astype(jnp.float32)

    def fold(gamma, beta, mean, var):
        s = gamma / jnp.sqrt(var + BN_EPS)
        return s, beta - mean * s

    s1, t1 = fold(*params["bn1"])
    s2, t2 = fold(*params["bn2"])
    h = jnp.maximum((x @ params["w1"] + params["b1"]) * s1 + t1, 0.0)
    h = jnp.maximum((h @ params["w2"] + params["b2"]) * s2 + t2, 0.0)
    return h @ params["w3"] + params["b3"]


if __name__ == "__main__":
    key = jax.random.PRNGKey(0)
    k_x, k_p = jax.random.split(key)

    # Small shapes: batch=8, NCHW input (8, 4, 8, 8) -> flattened features = 256
    B, C, H, W = 8, 4, 8, 8
    in_channel = C * H * W          # Linear's in_features must equal flattened size
    out_channel = 10

    x = jax.random.normal(k_x, (B, C, H, W), jnp.float32)
    params = init_params(k_p, in_channel, out_channel)
    ref = reference_forward(x, params)

    # f32-operand path: matches the eval-mode reference to 1e-4.
    prep_f32 = prepare_params(params, operand_dtype=jnp.float32)
    fwd_f32 = jax.jit(functools.partial(cnn_policy_forward, prep=prep_f32))
    out = jax.block_until_ready(fwd_f32(x))
    assert out.shape == (B, out_channel), out.shape
    assert jnp.allclose(out, ref, atol=1e-4, rtol=1e-4), "f32 mismatch vs reference"

    # bf16-operand / f32-accumulate path (the perf lever on v5e/v6e/v7x).
    prep_bf16 = prepare_params(params, operand_dtype=jnp.bfloat16)
    fwd_bf16 = jax.jit(functools.partial(cnn_policy_forward, prep=prep_bf16))
    out_bf16 = jax.block_until_ready(fwd_bf16(x))
    assert out_bf16.shape == (B, out_channel), out_bf16.shape
    assert jnp.allclose(out_bf16, ref, atol=5e-2, rtol=5e-2), "bf16 mismatch vs reference"

    print("KERNEL_OK")
</pallas_src>

<mosaic_0001>
module attributes {stable_mosaic.version = 11 : i64} {
  func.func @_mlp_kernel(%arg0: i32, %arg1: memref<8x256xf32, #tpu.memory_space<vmem>>, %arg2: memref<256x128xf32, #tpu.memory_space<vmem>>, %arg3: memref<128x128xf32, #tpu.memory_space<vmem>>, %arg4: memref<128x128xf32, #tpu.memory_space<vmem>>, %arg5: memref<8x128xf32, #tpu.memory_space<vmem>>, %arg6: memref<8x128xf32, #tpu.memory_space<vmem>>) attributes {dimension_semantics = [#tpu.dimension_semantics<parallel>], iteration_bounds = array<i64: 1>, scalar_prefetch = 0 : i64, scratch_operands = 0 : i64, tpu.core_type = #tpu.core_type<tc>, window_params = [{transform_indices = @transform_0, window_bounds = array<i64: 8, 256>}, {pipeline_mode = #tpu.pipeline_mode<synchronous>, transform_indices = @transform_1, window_bounds = array<i64: 256, 128>}, {pipeline_mode = #tpu.pipeline_mode<synchronous>, transform_indices = @transform_2, window_bounds = array<i64: 128, 128>}, {pipeline_mode = #tpu.pipeline_mode<synchronous>, transform_indices = @transform_3, window_bounds = array<i64: 128, 128>}, {pipeline_mode = #tpu.pipeline_mode<synchronous>, transform_indices = @transform_4, window_bounds = array<i64: 8, 128>}, {transform_indices = @transform_5, window_bounds = array<i64: 8, 128>}]} {
    %c0 = arith.constant 0 : index
    %c0_0 = arith.constant 0 : index
    %0 = vector.load %arg1[%c0, %c0_0] : memref<8x256xf32, #tpu.memory_space<vmem>>, vector<8x256xf32>
    %c0_1 = arith.constant 0 : index
    %c0_2 = arith.constant 0 : index
    %1 = vector.load %arg2[%c0_1, %c0_2] : memref<256x128xf32, #tpu.memory_space<vmem>>, vector<256x128xf32>
    %cst = arith.constant dense<0.000000e+00> : vector<8x128xf32>
    %2 = tpu.matmul %0, %1, %cst {dimension_numbers = #tpu.dot_dimension_numbers<[1], [0], [0], [1], [0, 0, 1, 1], [], []>} : vector<8x256xf32>, vector<256x128xf32>, vector<8x128xf32> -> vector<8x128xf32>
    %c0_3 = arith.constant 0 : index
    %c0_4 = arith.constant 0 : index
    %3 = vector.load %arg5[%c0_3, %c0_4] : memref<8x128xf32, #tpu.memory_space<vmem>>, vector<1x128xf32>
    %4 = vector.broadcast %3 : vector<1x128xf32> to vector<8x128xf32>
    %5 = arith.addf %2, %4 : vector<8x128xf32>
    %cst_5 = arith.constant 0.000000e+00 : f32
    %6 = vector.broadcast %cst_5 : f32 to vector<8x128xf32>
    %7 = arith.maximumf %5, %6 : vector<8x128xf32>
    %c0_6 = arith.constant 0 : index
    %c0_7 = arith.constant 0 : index
    %8 = vector.load %arg3[%c0_6, %c0_7] : memref<128x128xf32, #tpu.memory_space<vmem>>, vector<128x128xf32>
    %cst_8 = arith.constant dense<0.000000e+00> : vector<8x128xf32>
    %9 = tpu.matmul %7, %8, %cst_8 {dimension_numbers = #tpu.dot_dimension_numbers<[1], [0], [0], [1], [0, 0, 1, 1], [], []>} : vector<8x128xf32>, vector<128x128xf32>, vector<8x128xf32> -> vector<8x128xf32>
    %c1 = arith.constant 1 : index
    %c0_9 = arith.constant 0 : index
    %10 = vector.load %arg5[%c1, %c0_9] : memref<8x128xf32, #tpu.memory_space<vmem>>, vector<1x128xf32>
    %11 = vector.broadcast %10 : vector<1x128xf32> to vector<8x128xf32>
    %12 = arith.addf %9, %11 : vector<8x128xf32>
    %cst_10 = arith.constant 0.000000e+00 : f32
    %13 = vector.broadcast %cst_10 : f32 to vector<8x128xf32>
    %14 = arith.maximumf %12, %13 : vector<8x128xf32>
    %c0_11 = arith.constant 0 : index
    %c0_12 = arith.constant 0 : index
    %15 = vector.load %arg4[%c0_11, %c0_12] : memref<128x128xf32, #tpu.memory_space<vmem>>, vector<128x128xf32>
    %cst_13 = arith.constant dense<0.000000e+00> : vector<8x128xf32>
    %16 = tpu.matmul %14, %15, %cst_13 {dimension_numbers = #tpu.dot_dimension_numbers<[1], [0], [0], [1], [0, 0, 1, 1], [], []>} : vector<8x128xf32>, vector<128x128xf32>, vector<8x128xf32> -> vector<8x128xf32>
    %c2 = arith.constant 2 : index
    %c0_14 = arith.constant 0 : index
    %17 = vector.load %arg5[%c2, %c0_14] : memref<8x128xf32, #tpu.memory_space<vmem>>, vector<1x128xf32>
    %18 = vector.broadcast %17 : vector<1x128xf32> to vector<8x128xf32>
    %19 = arith.addf %16, %18 : vector<8x128xf32>
    %c0_15 = arith.constant 0 : index
    %c0_16 = arith.constant 0 : index
    %20 = vector.load %arg6[%c0_15, %c0_16] : memref<8x128xf32, #tpu.memory_space<vmem>>, vector<8x128xf32>
    tpu.vector_store %arg6[%c0_15, %c0_16], %19 {strides = array<i32>} : memref<8x128xf32, #tpu.memory_space<vmem>>, vector<8x128xf32>,
    return
  }
  func.func @transform_0(%arg0: i32) -> (i32, i32) {
    %c0_i32 = arith.constant 0 : i32
    %c0_i32_0 = arith.constant 0 : i32
    return %arg0, %c0_i32 : i32, i32
  }
  func.func @transform_1(%arg0: i32) -> (i32, i32) {
    %c0_i32 = arith.constant 0 : i32
    %c0_i32_0 = arith.constant 0 : i32
    %c0_i32_1 = arith.constant 0 : i32
    return %c0_i32, %c0_i32_0 : i32, i32
  }
  func.func @transform_2(%arg0: i32) -> (i32, i32) {
    %c0_i32 = arith.constant 0 : i32
    %c0_i32_0 = arith.constant 0 : i32
    %c0_i32_1 = arith.constant 0 : i32
    return %c0_i32, %c0_i32_0 : i32, i32
  }
  func.func @transform_3(%arg0: i32) -> (i32, i32) {
    %c0_i32 = arith.constant 0 : i32
    %c0_i32_0 = arith.constant 0 : i32
    %c0_i32_1 = arith.constant 0 : i32
    return %c0_i32, %c0_i32_0 : i32, i32
  }
  func.func @transform_4(%arg0: i32) -> (i32, i32) {
    %c0_i32 = arith.constant 0 : i32
    %c0_i32_0 = arith.constant 0 : i32
    %c0_i32_1 = arith.constant 0 : i32
    return %c0_i32, %c0_i32_0 : i32, i32
  }
  func.func @transform_5(%arg0: i32) -> (i32, i32) {
    %c0_i32 = arith.constant 0 : i32
    %c0_i32_0 = arith.constant 0 : i32
    return %arg0, %c0_i32 : i32, i32
  }
}

</mosaic_0001>

<llo_original>
// kernel: cnn_policy_forward.1
$region0: #{cnn_policy_forward.1}
  #allocation0 [shape = 'u32[]', space=smem, size = 0x4, offset = 0x4, fixed_abs, tag = 'smem constant byte address 0x4 - core index']
  #allocation1 [shape = 'u32[144,128]{1,0:T(1,128)}', space=vmem, size = 0x12000, scoped, tag = 'internal scratch']
  %s0 = inlined_call_operand.vmem [shape: f32[8,256], index: 0, kind: input, shape index: {}]
  %s1 = inlined_call_operand.vmem [shape: f32[256,128], index: 1, kind: input, shape index: {}]
  %s2 = inlined_call_operand.hbm [shape: f32[128,128], index: 2, kind: input, shape index: {}]
  %s3 = inlined_call_operand.hbm [shape: f32[128,128], index: 3, kind: input, shape index: {}]
  %s4 = inlined_call_operand.vmem [shape: f32[8,128], index: 4, kind: input, shape index: {}]
  %s5 = inlined_call_operand.hbm [shape: f32[8,128], index: 5, kind: output, shape index: {}]
  %s6 = sld [smem:[#allocation0]]
  $region38: #{cnn_policy_forward.1} parent=0
    _
  %s8 = ssub.s32 1, %s6
  %s9 = scalar_select 0, %s8, %s6
  $region1: #{cnn_policy_forward.1} parent=0
    #allocation2 [shape = 'u8[65536]{0}', space=vmem, size = 0x10000, scoped, tag = 'input window, operand 2, single buffered']
    #allocation3 [shape = 's32[1]{0}', space=sflag, size = 0x4, scoped, tag = 'scoped memory for cnn_policy_forward.1']
    #allocation4 [shape = 's32[1]{0}', space=sflag, size = 0x4, scoped, tag = 'scoped memory for cnn_policy_forward.1']
    #allocation5 [shape = 'u8[65536]{0}', space=vmem, size = 0x10000, scoped, tag = 'input window, operand 3, single buffered']
    #allocation6 [shape = 's32[1]{0}', space=sflag, size = 0x4, scoped, tag = 'scoped memory for cnn_policy_forward.1']
    #allocation7 [shape = 'u8[4096]{0}', space=vmem, size = 0x1000, scoped, tag = 'output window, operand 0, single buffered']
    %10 = vsyncpa [#allocation3], 0
    %11 = vsyncpa [#allocation6], 0
    %12 = vsyncpa [#allocation4], 0
    // Predicated region
    $region2: #{cnn_policy_forward.1} parent=1 // pred_check
      _
    $region3: #{cnn_policy_forward.1} parent=1 // pred_check_branch
      %14 = sbr.rel (0) target = $region5
    $region4: #{cnn_policy_forward.1} parent=1 // pred_region
      _
    $region5: #{cnn_policy_forward.1} parent=1 // pred_fallthru
      _
    // Predicated region
    $region6: #{cnn_policy_forward.1} parent=1 // pred_check
      _
    $region7: #{cnn_policy_forward.1} parent=1 // pred_check_branch
      %16 = sbr.rel (0) target = $region9
    $region8: #{cnn_policy_forward.1} parent=1 // pred_region
      _
    $region9: #{cnn_policy_forward.1} parent=1 // pred_fallthru
      _
    // Predicated region
    $region10: #{cnn_policy_forward.1} parent=1 // pred_check
      _
    $region11: #{cnn_policy_forward.1} parent=1 // pred_check_branch
      %18 = sbr.rel (0) target = $region13
    $region12: #{cnn_policy_forward.1} parent=1 // pred_region
      %s20 = ssub.s32 2048, 2048
      %21 = vsyncadd [#allocation3], %s20
      %s22 = sshll.u32 [#allocation2], 4
      %s23 = int_to_ptr.vmem [resolvable:$true] %s22
      %28 = dma.hbm_to_vmem [thread:$0]  %s2, 2048, %s23, [#allocation3], 128, 128, 8
    $region13: #{cnn_policy_forward.1} parent=1 // pred_fallthru
      _
    // Predicated region
    $region14: #{cnn_policy_forward.1} parent=1 // pred_check
      _
    $region15: #{cnn_policy_forward.1} parent=1 // pred_check_branch
      %30 = sbr.rel (0) target = $region17
    $region16: #{cnn_policy_forward.1} parent=1 // pred_region
      %s32 = ssub.s32 2048, 2048
      %33 = vsyncadd [#allocation6], %s32
      %s34 = sshll.u32 [#allocation5], 4
      %s35 = int_to_ptr.vmem [resolvable:$true] %s34
      %40 = dma.hbm_to_vmem [thread:$0]  %s3, 2048, %s35, [#allocation6], 128, 128, 8
    $region17: #{cnn_policy_forward.1} parent=1 // pred_fallthru
      _
    // Predicated region
    $region18: #{cnn_policy_forward.1} parent=1 // pred_check
      _
    $region19: #{cnn_policy_forward.1} parent=1 // pred_check_branch
      %42 = sbr.rel (0) target = $region21
    $region20: #{cnn_policy_forward.1} parent=1 // pred_region
      _
    $region21: #{cnn_policy_forward.1} parent=1 // pred_fallthru
      _
    // Predicated region
    $region22: #{cnn_policy_forward.1} parent=1 // pred_check
      _
    $region23: #{cnn_policy_forward.1} parent=1 // pred_check_branch
      %44 = sbr.rel (0) target = $region25
    $region24: #{cnn_policy_forward.1} parent=1 // pred_region
      %45 = dma.done [#allocation3], 2048
    $region25: #{cnn_policy_forward.1} parent=1 // pred_fallthru
      _
    // Predicated region
    $region26: #{cnn_policy_forward.1} parent=1 // pred_check
      _
    $region27: #{cnn_policy_forward.1} parent=1 // pred_check_branch
      %47 = sbr.rel (0) target = $region29
    $region28: #{cnn_policy_forward.1} parent=1 // pred_region
      %48 = dma.done [#allocation6], 2048
    $region29: #{cnn_policy_forward.1} parent=1 // pred_fallthru
      _
    %v49 = vld [vmem:[%s0] sm:$0xff]
    %v50 = vld [vmem:[%s0 + $0x8] sm:$0xff]
    %v51 = vld [vmem:[%s1] sm:$0xff]
    %v52 = vld [vmem:[%s1 + $0x8] sm:$0xff]
    %v53 = vld [vmem:[%s1 + $0x10] sm:$0xff]
    %v54 = vld [vmem:[%s1 + $0x18] sm:$0xff]
    %v55 = vld [vmem:[%s1 + $0x20] sm:$0xff]
    %v56 = vld [vmem:[%s1 + $0x28] sm:$0xff]
    %v57 = vld [vmem:[%s1 + $0x30] sm:$0xff]
    %v58 = vld [vmem:[%s1 + $0x38] sm:$0xff]
    %v59 = vld [vmem:[%s1 + $0x40] sm:$0xff]
    %v60 = vld [vmem:[%s1 + $0x48] sm:$0xff]
    %v61 = vld [vmem:[%s1 + $0x50] sm:$0xff]
    %v62 = vld [vmem:[%s1 + $0x58] sm:$0xff]
    %v63 = vld [vmem:[%s1 + $0x60] sm:$0xff]
    %v64 = vld [vmem:[%s1 + $0x68] sm:$0xff]
    %v65 = vld [vmem:[%s1 + $0x70] sm:$0xff]
    %v66 = vld [vmem:[%s1 + $0x78] sm:$0xff]
    %v67 = vld [vmem:[%s1 + $0x80] sm:$0xff]
    %v68 = vld [vmem:[%s1 + $0x88] sm:$0xff]
    %v69 = vld [vmem:[%s1 + $0x90] sm:$0xff]
    %v70 = vld [vmem:[%s1 + $0x98] sm:$0xff]
    %v71 = vld [vmem:[%s1 + $0xa0] sm:$0xff]
    %v72 = vld [vmem:[%s1 + $0xa8] sm:$0xff]
    %v73 = vld [vmem:[%s1 + $0xb0] sm:$0xff]
    %v74 = vld [vmem:[%s1 + $0xb8] sm:$0xff]
    %v75 = vld [vmem:[%s1 + $0xc0] sm:$0xff]
    %v76 = vld [vmem:[%s1 + $0xc8] sm:$0xff]
    %v77 = vld [vmem:[%s1 + $0xd0] sm:$0xff]
    %v78 = vld [vmem:[%s1 + $0xd8] sm:$0xff]
    %v79 = vld [vmem:[%s1 + $0xe0] sm:$0xff]
    %v80 = vld [vmem:[%s1 + $0xe8] sm:$0xff]
    %v81 = vld [vmem:[%s1 + $0xf0] sm:$0xff]
    %v82 = vld [vmem:[%s1 + $0xf8] sm:$0xff]
    %v83 = vld [vmem:[%s4] sm:$0x1]
    %v84 = vlaneseq
    %v85 = vshrl.u32 %v84, 7
    %v86 = vsub.s32 0, %v85
    %v87 = vrot.slane %v83, %v86
    %88 = vmatprep.subr.mxu0 0.0
    %89 = vmatpush1.msra.mxu0 %v51
    %90 = vmatprep.subr.mxu0 0.0
    %91 = vmatpush1.msra.mxu0 %v52
    %92 = vmatprep.subr.mxu0 0.0
    %93 = vmatpush1.msra.mxu0 %v53
    %94 = vmatprep.subr.mxu0 0.0
    %95 = vmatpush1.msra.mxu0 %v54
    %96 = vmatprep.subr.mxu0 0.0
    %97 = vmatpush1.msra.mxu0 %v55
    %98 = vmatprep.subr.mxu0 0.0
    %99 = vmatpush1.msra.mxu0 %v56
    %100 = vmatprep.subr.mxu0 0.0
    %101 = vmatpush1.msra.mxu0 %v57
    %102 = vmatprep.subr.mxu0 0.0
    %103 = vmatpush1.msra.mxu0 %v58
    %104 = vmatprep.subr.mxu0 0.0
    %105 = vmatpush1.msra.mxu0 %v59
    %106 = vmatprep.subr.mxu0 0.0
    %107 = vmatpush1.msra.mxu0 %v60
    %108 = vmatprep.subr.mxu0 0.0
    %109 = vmatpush1.msra.mxu0 %v61
    %110 = vmatprep.subr.mxu0 0.0
    %111 = vmatpush1.msra.mxu0 %v62
    %112 = vmatprep.subr.mxu0 0.0
    %113 = vmatpush1.msra.mxu0 %v63
    %114 = vmatprep.subr.mxu0 0.0
    %115 = vmatpush1.msra.mxu0 %v64
    %116 = vmatprep.subr.mxu0 0.0
    %117 = vmatpush1.msra.mxu0 %v65
    %118 = vmatprep.subr.mxu0 0.0
    %119 = vmatpush1.msra.mxu0 %v66
    %120 = vmatprep.subr.mxu0 0.0
    %121 = vmatpush1.msra.mxu0 %v67
    %122 = vmatprep.subr.mxu0 0.0
    %123 = vmatpush1.msra.mxu0 %v68
    %124 = vmatprep.subr.mxu0 0.0
    %125 = vmatpush1.msra.mxu0 %v69
    %126 = vmatprep.subr.mxu0 0.0
    %127 = vmatpush1.msra.mxu0 %v70
    %128 = vmatprep.subr.mxu0 0.0
    %129 = vmatpush1.msra.mxu0 %v71
    %130 = vmatprep.subr.mxu0 0.0
    %131 = vmatpush1.msra.mxu0 %v72
    %132 = vmatprep.subr.mxu0 0.0
    %133 = vmatpush1.msra.mxu0 %v73
    %134 = vmatprep.subr.mxu0 0.0
    %135 = vmatpush1.msra.mxu0 %v74
    %136 = vmatprep.subr.mxu0 0.0
    %137 = vmatpush1.msra.mxu0 %v75
    %138 = vmatprep.subr.mxu0 0.0
    %139 = vmatpush1.msra.mxu0 %v76
    %140 = vmatprep.subr.mxu0 0.0
    %141 = vmatpush1.msra.mxu0 %v77
    %142 = vmatprep.subr.mxu0 0.0
    %143 = vmatpush1.msra.mxu0 %v78
    %144 = vmatprep.subr.mxu0 0.0
    %145 = vmatpush1.msra.mxu0 %v79
    %146 = vmatprep.subr.mxu0 0.0
    %147 = vmatpush1.msra.mxu0 %v80
    %148 = vmatprep.subr.mxu0 0.0
    %149 = vmatpush1.msra.mxu0 %v81
    %150 = vmatprep.subr.mxu0 0.0
    %151 = vmatpush1.msra.mxu0 %v82
    %152 = vmatprep.mubr.f32.mxu0 %v50
    %153 = vmatmul.mubr.f32.gmra.mrb[0].mxu0 %v49
    %v154 = vpop.f32.mrb[0].mxu0
    %v155 = vadd.f32 %v87, %v154
    %v156 = vpop.f32.mrb[0].mxu0
    %157 = vdwg.mxu0
    %v158 = vmax.f32 %v155, 0.0
    %v159 = vld [vmem:[#allocation2] sm:$0xff]
    %v160 = vld [vmem:[#allocation2 + $0x8] sm:$0xff]
    %v161 = vld [vmem:[#allocation2 + $0x10] sm:$0xff]
    %v162 = vld [vmem:[#allocation2 + $0x18] sm:$0xff]
    %v163 = vld [vmem:[#allocation2 + $0x20] sm:$0xff]
    %v164 = vld [vmem:[#allocation2 + $0x28] sm:$0xff]
    %v165 = vld [vmem:[#allocation2 + $0x30] sm:$0xff]
    %v166 = vld [vmem:[#allocation2 + $0x38] sm:$0xff]
    %v167 = vld [vmem:[#allocation2 + $0x40] sm:$0xff]
    %v168 = vld [vmem:[#allocation2 + $0x48] sm:$0xff]
    %v169 = vld [vmem:[#allocation2 + $0x50] sm:$0xff]
    %v170 = vld [vmem:[#allocation2 + $0x58] sm:$0xff]
    %v171 = vld [vmem:[#allocation2 + $0x60] sm:$0xff]
    %v172 = vld [vmem:[#allocation2 + $0x68] sm:$0xff]
    %v173 = vld [vmem:[#allocation2 + $0x70] sm:$0xff]
    %v174 = vld [vmem:[#allocation2 + $0x78] sm:$0xff]
    %v175 = vld [vmem:[%s4 + $0x1] sm:$0x1]
    %v176 = vlaneseq
    %v177 = vshrl.u32 %v176, 7
    %v178 = vsub.s32 0, %v177
    %v179 = vrot.slane %v175, %v178
    %180 = vmatprep.subr.mxu0 0.0
    %181 = vmatpush1.msra.mxu0 %v159
    %182 = vmatprep.subr.mxu0 0.0
    %183 = vmatpush1.msra.mxu0 %v160
    %184 = vmatprep.subr.mxu0 0.0
    %185 = vmatpush1.msra.mxu0 %v161
    %186 = vmatprep.subr.mxu0 0.0
    %187 = vmatpush1.msra.mxu0 %v162
    %188 = vmatprep.subr.mxu0 0.0
    %189 = vmatpush1.msra.mxu0 %v163
    %190 = vmatprep.subr.mxu0 0.0
    %191 = vmatpush1.msra.mxu0 %v164
    %192 = vmatprep.subr.mxu0 0.0
    %193 = vmatpush1.msra.mxu0 %v165
    %194 = vmatprep.subr.mxu0 0.0
    %195 = vmatpush1.msra.mxu0 %v166
    %196 = vmatprep.subr.mxu0 0.0
    %197 = vmatpush1.msra.mxu0 %v167
    %198 = vmatprep.subr.mxu0 0.0
    %199 = vmatpush1.msra.mxu0 %v168
    %200 = vmatprep.subr.mxu0 0.0
    %201 = vmatpush1.msra.mxu0 %v169
    %202 = vmatprep.subr.mxu0 0.0
    %203 = vmatpush1.msra.mxu0 %v170
    %204 = vmatprep.subr.mxu0 0.0
    %205 = vmatpush1.msra.mxu0 %v171
    %206 = vmatprep.subr.mxu0 0.0
    %207 = vmatpush1.msra.mxu0 %v172
    %208 = vmatprep.subr.mxu0 0.0
    %209 = vmatpush1.msra.mxu0 %v173
    %210 = vmatprep.subr.mxu0 0.0
    %211 = vmatpush1.msra.mxu0 %v174
    %212 = vmatprep.subr.mxu0 0.0
    %213 = vmatpush1.msra.mxu0 0.0
    %214 = vmatprep.subr.mxu0 0.0
    %215 = vmatpush1.msra.mxu0 0.0
    %216 = vmatprep.subr.mxu0 0.0
    %217 = vmatpush1.msra.mxu0 0.0
    %218 = vmatprep.subr.mxu0 0.0
    %219 = vmatpush1.msra.mxu0 0.0
    %220 = vmatprep.subr.mxu0 0.0
    %221 = vmatpush1.msra.mxu0 0.0
    %222 = vmatprep.subr.mxu0 0.0
    %223 = vmatpush1.msra.mxu0 0.0
    %224 = vmatprep.subr.mxu0 0.0
    %225 = vmatpush1.msra.mxu0 0.0
    %226 = vmatprep.subr.mxu0 0.0
    %227 = vmatpush1.msra.mxu0 0.0
    %228 = vmatprep.subr.mxu0 0.0
    %229 = vmatpush1.msra.mxu0 0.0
    %230 = vmatprep.subr.mxu0 0.0
    %231 = vmatpush1.msra.mxu0 0.0
    %232 = vmatprep.subr.mxu0 0.0
    %233 = vmatpush1.msra.mxu0 0.0
    %234 = vmatprep.subr.mxu0 0.0
    %235 = vmatpush1.msra.mxu0 0.0
    %236 = vmatprep.subr.mxu0 0.0
    %237 = vmatpush1.msra.mxu0 0.0
    %238 = vmatprep.subr.mxu0 0.0
    %239 = vmatpush1.msra.mxu0 0.0
    %240 = vmatprep.subr.mxu0 0.0
    %241 = vmatpush1.msra.mxu0 0.0
    %242 = vmatprep.subr.mxu0 0.0
    %243 = vmatpush1.msra.mxu0 0.0
    %244 = vmatprep.mubr.f32.mxu0 0.0
    %245 = vmatmul.mubr.f32.gmra.mrb[0].mxu0 %v158
    %v246 = vpop.f32.mrb[0].mxu0
    %v247 = vadd.f32 %v179, %v246
    %v248 = vpop.f32.mrb[0].mxu0
    %249 = vdwg.mxu0
    %v250 = vmax.f32 %v247, 0.0
    %v251 = vld [vmem:[#allocation5] sm:$0xff]
    %v252 = vld [vmem:[#allocation5 + $0x8] sm:$0xff]
    %v253 = vld [vmem:[#allocation5 + $0x10] sm:$0xff]
    %v254 = vld [vmem:[#allocation5 + $0x18] sm:$0xff]
    %v255 = vld [vmem:[#allocation5 + $0x20] sm:$0xff]
    %v256 = vld [vmem:[#allocation5 + $0x28] sm:$0xff]
    %v257 = vld [vmem:[#allocation5 + $0x30] sm:$0xff]
    %v258 = vld [vmem:[#allocation5 + $0x38] sm:$0xff]
    %v259 = vld [vmem:[#allocation5 + $0x40] sm:$0xff]
    %v260 = vld [vmem:[#allocation5 + $0x48] sm:$0xff]
    %v261 = vld [vmem:[#allocation5 + $0x50] sm:$0xff]
    %v262 = vld [vmem:[#allocation5 + $0x58] sm:$0xff]
    %v263 = vld [vmem:[#allocation5 + $0x60] sm:$0xff]
    %v264 = vld [vmem:[#allocation5 + $0x68] sm:$0xff]
    %v265 = vld [vmem:[#allocation5 + $0x70] sm:$0xff]
    %v266 = vld [vmem:[#allocation5 + $0x78] sm:$0xff]
    %v267 = vld [vmem:[%s4 + $0x2] sm:$0x1]
    %v268 = vlaneseq
    %v269 = vshrl.u32 %v268, 7
    %v270 = vsub.s32 0, %v269
    %v271 = vrot.slane %v267, %v270
    %272 = vmatprep.subr.mxu0 0.0
    %273 = vmatpush1.msra.mxu0 %v251
    %274 = vmatprep.subr.mxu0 0.0
    %275 = vmatpush1.msra.mxu0 %v252
    %276 = vmatprep.subr.mxu0 0.0
    %277 = vmatpush1.msra.mxu0 %v253
    %278 = vmatprep.subr.mxu0 0.0
    %279 = vmatpush1.msra.mxu0 %v254
    %280 = vmatprep.subr.mxu0 0.0
    %281 = vmatpush1.msra.mxu0 %v255
    %282 = vmatprep.subr.mxu0 0.0
    %283 = vmatpush1.msra.mxu0 %v256
    %284 = vmatprep.subr.mxu0 0.0
    %285 = vmatpush1.msra.mxu0 %v257
    %286 = vmatprep.subr.mxu0 0.0
    %287 = vmatpush1.msra.mxu0 %v258
    %288 = vmatprep.subr.mxu0 0.0
    %289 = vmatpush1.msra.mxu0 %v259
    %290 = vmatprep.subr.mxu0 0.0
    %291 = vmatpush1.msra.mxu0 %v260
    %292 = vmatprep.subr.mxu0 0.0
    %293 = vmatpush1.msra.mxu0 %v261
    %294 = vmatprep.subr.mxu0 0.0
    %295 = vmatpush1.msra.mxu0 %v262
    %296 = vmatprep.subr.mxu0 0.0
    %297 = vmatpush1.msra.mxu0 %v263
    %298 = vmatprep.subr.mxu0 0.0
    %299 = vmatpush1.msra.mxu0 %v264
    %300 = vmatprep.subr.mxu0 0.0
    %301 = vmatpush1.msra.mxu0 %v265
    %302 = vmatprep.subr.mxu0 0.0
    %303 = vmatpush1.msra.mxu0 %v266
    %304 = vmatprep.subr.mxu0 0.0
    %305 = vmatpush1.msra.mxu0 0.0
    %306 = vmatprep.subr.mxu0 0.0
    %307 = vmatpush1.msra.mxu0 0.0
    %308 = vmatprep.subr.mxu0 0.0
    %309 = vmatpush1.msra.mxu0 0.0
    %310 = vmatprep.subr.mxu0 0.0
    %311 = vmatpush1.msra.mxu0 0.0
    %312 = vmatprep.subr.mxu0 0.0
    %313 = vmatpush1.msra.mxu0 0.0
    %314 = vmatprep.subr.mxu0 0.0
    %315 = vmatpush1.msra.mxu0 0.0
    %316 = vmatprep.subr.mxu0 0.0
    %317 = vmatpush1.msra.mxu0 0.0
    %318 = vmatprep.subr.mxu0 0.0
    %319 = vmatpush1.msra.mxu0 0.0
    %320 = vmatprep.subr.mxu0 0.0
    %321 = vmatpush1.msra.mxu0 0.0
    %322 = vmatprep.subr.mxu0 0.0
    %323 = vmatpush1.msra.mxu0 0.0
    %324 = vmatprep.subr.mxu0 0.0
    %325 = vmatpush1.msra.mxu0 0.0
    %326 = vmatprep.subr.mxu0 0.0
    %327 = vmatpush1.msra.mxu0 0.0
    %328 = vmatprep.subr.mxu0 0.0
    %329 = vmatpush1.msra.mxu0 0.0
    %330 = vmatprep.subr.mxu0 0.0
    %331 = vmatpush1.msra.mxu0 0.0
    %332 = vmatprep.subr.mxu0 0.0
    %333 = vmatpush1.msra.mxu0 0.0
    %334 = vmatprep.subr.mxu0 0.0
    %335 = vmatpush1.msra.mxu0 0.0
    %336 = vmatprep.mubr.f32.mxu0 0.0
    %337 = vmatmul.mubr.f32.gmra.mrb[0].mxu0 %v250
    %v338 = vpop.f32.mrb[0].mxu0
    %v339 = vadd.f32 %v271, %v338
    %v340 = vpop.f32.mrb[0].mxu0
    %341 = vdwg.mxu0
    %342 = vst [vmem:[#allocation7] sm:$0xff] %v339
    // Predicated region
    $region30: #{cnn_policy_forward.1} parent=1 // pred_check
      _
    $region31: #{cnn_policy_forward.1} parent=1 // pred_check_branch
      %344 = sbr.rel (0) target = $region33
    $region32: #{cnn_policy_forward.1} parent=1 // pred_region
      %s346 = ssub.s32 128, 128
      %347 = vsyncadd [#allocation4], %s346
      %s349 = sshll.u32 [#allocation7], 4
      %s350 = int_to_ptr.vmem [resolvable:$true] %s349
      %352 = dma.vmem_to_hbm [thread:$0]  %s350, 128, %s5, [#allocation4]
    $region33: #{cnn_policy_forward.1} parent=1 // pred_fallthru
      _
    // Predicated region
    $region34: #{cnn_policy_forward.1} parent=1 // pred_check
      _
    $region35: #{cnn_policy_forward.1} parent=1 // pred_check_branch
      %354 = sbr.rel (0) target = $region37
    $region36: #{cnn_policy_forward.1} parent=1 // pred_region
      %355 = dma.done [#allocation4], 128
    $region37: #{cnn_policy_forward.1} parent=1 // pred_fallthru
      _
    %356 = vsyncpa [#allocation3], 1
    %357 = vsyncpa [#allocation6], 1
    %358 = vsyncpa [#allocation4], 1

</llo_original>
